<compile_context>
chip_gen: v7x
topology: tpu7x:2x2x1
jax: 0.10.0
libtpu: 0.0.40
codegen_flags: <defaults>
</compile_context>

<pallas_src>
import functools

import jax
import jax.numpy as jnp
from jax.experimental import pallas as pl
from jax.experimental.pallas import tpu as pltpu


_VMEM_BUDGET = 20 << 20   # conservative working-set target: fits v7x's 64 MiB
                          # physical VMEM and the default scoped limits with headroom


def _round_up(x: int, m: int) -> int:
    return (x + m - 1) // m * m


def _pick_k_pad(K: int) -> int:
    """Zero-pad the contraction dim to a 128 multiple (lane-dense patch loads,
    full-width MXU passes) only when the extra zero columns cost <= 1/8 more
    patch HBM bytes (e.g. 588 -> 640).  Otherwise keep K: a full-dim block is
    still legal, and padded K is wasted bytes (v6e/v7x) / flops (v5e)."""
    K_pad = _round_up(K, 128)
    return K_pad if (K_pad - K) * 8 <= K else K


def _plan_m_tiles(M: int, K_pad: int, compute_itemsize: int):
    """Pick (TM, M_pad) for the streamed patch-row axis.

    Preferences, in order:
      * TM == M for small M (full-dim block: no (8,128) constraint, no pad)
      * TM divides M (no padded rows -> no post-kernel output slice copy)
      * TM a multiple of 128 (full MXU passes), else 16 (bf16 sublane packing)
      * >= 2 grid steps once M is large (v7x dual-TensorCore sharding)
      * double-buffered (TM, K_pad) patch tile bounded (~4 MiB of VMEM)
    """
    cap = (4 << 20) // max(1, 2 * K_pad * compute_itemsize)
    cap = max(64, min(512, cap))
    if M <= 256 or M <= cap:
        return M, M                                   # single full-dim block
    cap = min(cap, M // 2)                            # guarantee >= 2 grid steps
    for align in (128, 16, 8):
        t = cap - cap % align
        while t >= align:
            if M % t == 0:
                return t, M                           # exact divisor: no padding
            t -= align
    tm = max(16, cap - cap % 16)                      # fallback: pad rows (zeros)
    return tm, _round_up(M, tm)


def _plan_n_tiles(N: int, K_pad: int, TM: int, out_itemsize: int,
                  compute_itemsize: int):
    """Tile d_model only when keeping the whole weight resident would blow the
    VMEM budget (footprint counted with pessimistic double-buffering);
    otherwise TN == N and the weight/bias stay resident for the whole grid."""
    def footprint(tn):
        return (2 * TM * K_pad * compute_itemsize     # streamed patch tiles
                + 2 * K_pad * tn * compute_itemsize   # weight block
                + 2 * TM * tn * out_itemsize          # output tiles
                + 8 * tn * 4)                         # bias row (sublane-padded)
    if N % 128 != 0 or footprint(N) <= _VMEM_BUDGET:
        return N, 1, footprint(N)
    for tn in range(((N // 128) - 1) * 128, 0, -128):
        if N % tn == 0 and footprint(tn) <= _VMEM_BUDGET:
            return tn, N // tn, footprint(tn)
    return 128, N // 128, footprint(128)


def _patch_embed_kernel(p_ref, w_ref, b_ref, o_ref):
    # bf16 patch tile @ resident bf16 weight on the MXU with f32 accumulation,
    # then f32 bias add (VPU) and cast to the output dtype.
    acc = jnp.dot(p_ref[...], w_ref[...], preferred_element_type=jnp.float32)
    o_ref[...] = (acc + b_ref[...]).astype(o_ref.dtype)


def prepare_patch_embed_params(conv_weight, conv_bias, *,
                               compute_dtype=jnp.bfloat16):
    """One-time weight/bias preprocessing, hoisted out of the per-call path.

    conv_weight: [d_model, C, p, p] (PyTorch Conv2d layout)
    conv_bias:   [d_model]
    Returns (w_pad [K_pad, d_model] in compute_dtype, b_row [1, d_model] f32).

    Precision note (explicit, per review): compute_dtype=bf16 streams patches
    and weight in bf16 with f32 accumulation — the kernel is HBM-bound on
    v6e/v7x and bf16 is the native MXU path.  Pass compute_dtype=jnp.float32
    for full-precision operands.
    """
    d_model = conv_weight.shape[0]
    K = conv_weight.shape[1] * conv_weight.shape[2] * conv_weight.shape[3]
    K_pad = _pick_k_pad(K)
    w_mat = conv_weight.reshape(d_model, K).T               # [K, d_model], (c, ph, pw) rows
    if K_pad > K:
        w_mat = jnp.pad(w_mat, ((0, K_pad - K), (0, 0)))
    return w_mat.astype(compute_dtype), conv_bias.astype(jnp.float32).reshape(1, d_model)


@functools.partial(jax.jit, static_argnames=("patch_size", "out_dtype"))
def patch_embed_forward(x, w_pad, b_row, *, patch_size, out_dtype=None):
    """Forward pass of PatchEmbeddings.

    x:      [B, C, H, W]         (NCHW, like PyTorch)
    w_pad:  [K_pad, d_model]     from prepare_patch_embed_params
    b_row:  [1, d_model] float32 from prepare_patch_embed_params
    returns [h*w, B, d_model]
    """
    B, C, H, W = x.shape
    p = patch_size
    h, w = H // p, W // p
    K = C * p * p
    K_pad, d_model = w_pad.shape
    assert K_pad >= K
    compute_dtype = w_pad.dtype
    out_dtype = jnp.dtype(x.dtype if out_dtype is None else out_dtype)
    out_itemsize = out_dtype.itemsize
    c_itemsize = jnp.dtype(compute_dtype).itemsize

    M = h * w * B
    TM, M_pad = _plan_m_tiles(M, K_pad, c_itemsize)
    TN, grid_n, fp = _plan_n_tiles(d_model, K_pad, TM, out_itemsize, c_itemsize)
    grid_m = M_pad // TM

    # Patch extraction: rows ordered (hi, wi, b) so the kernel output reshapes
    # directly to [h*w, B, d_model]; columns ordered (c, ph, pw), matching
    # conv_weight.reshape(d_model, C*p*p).  XLA fuses this with the cast/pad
    # below into a single pass writing the compute-dtype patch matrix once.
    # TODO(synk): fold this reorder into the kernel's HBM->VMEM DMA instead.
    patches = (
        x.reshape(B, C, h, p, w, p)
         .transpose(2, 4, 0, 1, 3, 5)                 # [h, w, B, C, p, p]
         .reshape(M, K)
         .astype(compute_dtype)
    )
    if M_pad > M or K_pad > K:
        patches = jnp.pad(patches, ((0, M_pad - M), (0, K_pad - K)))

    cost = pl.CostEstimate(
        flops=2 * M_pad * K_pad * d_model,
        transcendentals=0,
        bytes_accessed=(grid_n * M_pad * K_pad * c_itemsize   # patches (per N stripe)
                        + K_pad * d_model * c_itemsize        # weight (read once)
                        + M_pad * d_model * out_itemsize      # output (written once)
                        + d_model * 4),                       # bias
    )

    out = pl.pallas_call(
        _patch_embed_kernel,
        out_shape=jax.ShapeDtypeStruct((M_pad, d_model), out_dtype),
        grid=(grid_n, grid_m),       # n outer: the weight column stripe stays resident
        in_specs=[
            # Streamed patch rows (auto double-buffered).  If xprof shows
            # exposed DMA on v7x, bump with pipeline_mode=pl.Buffered(3).
            pl.BlockSpec((TM, K_pad), lambda n, m: (m, 0)),
            # Weight / bias: constant block index within an n stripe -> resident.
            pl.BlockSpec((K_pad, TN), lambda n, m: (0, n)),
            pl.BlockSpec((1, TN), lambda n, m: (0, n)),
        ],
        out_specs=pl.BlockSpec((TM, TN), lambda n, m: (m, n)),
        compiler_params=pltpu.CompilerParams(
            dimension_semantics=("parallel", "parallel"),
            vmem_limit_bytes=int(min(48 << 20, max(32 << 20, 2 * fp))),
        ),
        cost_estimate=cost,
    )(patches, w_pad, b_row)

    if M_pad > M:
        out = out[:M]   # only hit when M has no 16/128-aligned divisor <= 512
    # == x.permute(2,3,0,1).view(h*w, bs, c) in the PyTorch module.
    return out.reshape(h * w, B, d_model)


def patch_embeddings(x, conv_weight, conv_bias, patch_size,
                     compute_dtype=jnp.bfloat16, out_dtype=None):
    """Drop-in equivalent of PatchEmbeddings.forward.  For repeated calls,
    prefer prepare_patch_embed_params(...) once + patch_embed_forward(...)."""
    w_pad, b_row = prepare_patch_embed_params(conv_weight, conv_bias,
                                              compute_dtype=compute_dtype)
    return patch_embed_forward(x, w_pad, b_row, patch_size=patch_size,
                               out_dtype=out_dtype)


if __name__ == "__main__":
    # Small deterministic example consistent with the module:
    # d_model=32, patch_size=4, in_channels=4, image 16x16, batch 2.
    B, C, H, W = 2, 4, 16, 16
    patch_size = 4
    d_model = 32

    key = jax.random.PRNGKey(0)
    kx, kw, kb = jax.random.split(key, 3)
    x = jax.random.normal(kx, (B, C, H, W), dtype=jnp.float32)
    conv_weight = jax.random.normal(
        kw, (d_model, C, patch_size, patch_size), dtype=jnp.float32) * 0.05
    conv_bias = jax.random.normal(kb, (d_model,), dtype=jnp.float32) * 0.05

    # One-time param prep (hoisted out of the jitted per-call path).
    w_pad, b_row = prepare_patch_embed_params(conv_weight, conv_bias)

    out = patch_embed_forward(x, w_pad, b_row, patch_size=patch_size)
    out = jax.block_until_ready(out)

    # Pure-JAX f32 reference (strided conv == patchify + linear), same ordering.
    h, w = H // patch_size, W // patch_size
    ref_patches = (
        x.reshape(B, C, h, patch_size, w, patch_size)
         .transpose(2, 4, 0, 1, 3, 5)
         .reshape(h * w * B, C * patch_size * patch_size)
    )
    ref = (ref_patches @ conv_weight.reshape(d_model, -1).T + conv_bias)
    ref = ref.reshape(h * w, B, d_model)

    assert out.shape == (h * w, B, d_model), out.shape
    # bf16-streamed operands (f32 accumulation) vs full-f32 reference.
    assert jnp.allclose(out, ref, atol=3e-2, rtol=3e-2), float(
        jnp.max(jnp.abs(out - ref)))
    print("KERNEL_OK")
</pallas_src>

<mosaic_0001>
module attributes {stable_mosaic.version = 11 : i64} {
  func.func @_patch_embed_kernel(%arg0: i32, %arg1: i32, %arg2: memref<32x64xbf16, #tpu.memory_space<vmem>>, %arg3: memref<64x32xbf16, #tpu.memory_space<vmem>>, %arg4: memref<1x32xf32, #tpu.memory_space<vmem>>, %arg5: memref<32x32xf32, #tpu.memory_space<vmem>>) attributes {dimension_semantics = [#tpu.dimension_semantics<parallel>, #tpu.dimension_semantics<parallel>], iteration_bounds = array<i64: 1, 1>, scalar_prefetch = 0 : i64, scratch_operands = 0 : i64, tpu.core_type = #tpu.core_type<tc>, window_params = [{transform_indices = @transform_0, window_bounds = array<i64: 32, 64>}, {transform_indices = @transform_1, window_bounds = array<i64: 64, 32>}, {transform_indices = @transform_2, window_bounds = array<i64: 1, 32>}, {transform_indices = @transform_3, window_bounds = array<i64: 32, 32>}]} {
    %c0 = arith.constant 0 : index
    %c0_0 = arith.constant 0 : index
    %0 = vector.load %arg2[%c0, %c0_0] : memref<32x64xbf16, #tpu.memory_space<vmem>>, vector<32x64xbf16>
    %c0_1 = arith.constant 0 : index
    %c0_2 = arith.constant 0 : index
    %1 = vector.load %arg3[%c0_1, %c0_2] : memref<64x32xbf16, #tpu.memory_space<vmem>>, vector<64x32xbf16>
    %cst = arith.constant dense<0.000000e+00> : vector<32x32xf32>
    %2 = tpu.matmul %0, %1, %cst {dimension_numbers = #tpu.dot_dimension_numbers<[1], [0], [0], [1], [0, 0, 1, 1], [], []>} : vector<32x64xbf16>, vector<64x32xbf16>, vector<32x32xf32> -> vector<32x32xf32>
    %c0_3 = arith.constant 0 : index
    %c0_4 = arith.constant 0 : index
    %3 = vector.load %arg4[%c0_3, %c0_4] : memref<1x32xf32, #tpu.memory_space<vmem>>, vector<1x32xf32>
    %4 = vector.broadcast %3 : vector<1x32xf32> to vector<32x32xf32>
    %5 = arith.addf %2, %4 : vector<32x32xf32>
    %c0_5 = arith.constant 0 : index
    %c0_6 = arith.constant 0 : index
    %6 = vector.load %arg5[%c0_5, %c0_6] : memref<32x32xf32, #tpu.memory_space<vmem>>, vector<32x32xf32>
    tpu.vector_store %arg5[%c0_5, %c0_6], %5 {strides = array<i32>} : memref<32x32xf32, #tpu.memory_space<vmem>>, vector<32x32xf32>,
    return
  }
  func.func @transform_0(%arg0: i32, %arg1: i32) -> (i32, i32) {
    %c0_i32 = arith.constant 0 : i32
    %c0_i32_0 = arith.constant 0 : i32
    return %arg1, %c0_i32 : i32, i32
  }
  func.func @transform_1(%arg0: i32, %arg1: i32) -> (i32, i32) {
    %c0_i32 = arith.constant 0 : i32
    %c0_i32_0 = arith.constant 0 : i32
    return %c0_i32, %arg0 : i32, i32
  }
  func.func @transform_2(%arg0: i32, %arg1: i32) -> (i32, i32) {
    %c0_i32 = arith.constant 0 : i32
    %c0_i32_0 = arith.constant 0 : i32
    return %c0_i32, %arg0 : i32, i32
  }
  func.func @transform_3(%arg0: i32, %arg1: i32) -> (i32, i32) {
    %c0_i32 = arith.constant 0 : i32
    return %arg1, %arg0 : i32, i32
  }
}

</mosaic_0001>

<llo_original>
// kernel: patch_embed_forward.1
$region0: #{patch_embed_forward.1}
  #allocation0 [shape = 'u32[]', space=smem, size = 0x4, offset = 0x4, fixed_abs, tag = 'smem constant byte address 0x4 - core index']
  #allocation1 [shape = 'u32[144,128]{1,0:T(1,128)}', space=vmem, size = 0x12000, scoped, tag = 'internal scratch']
  %s0 = inlined_call_operand.vmem [shape: bf16[32,64], index: 0, kind: input, shape index: {}]
  %s1 = inlined_call_operand.vmem [shape: bf16[64,32], index: 1, kind: input, shape index: {}]
  %s2 = inlined_call_operand.vmem [shape: f32[1,32], index: 2, kind: input, shape index: {}]
  %s3 = inlined_call_operand.hbm [shape: f32[32,32], index: 3, kind: output, shape index: {}]
  %s4 = sld [smem:[#allocation0]]
  $region22: #{patch_embed_forward.1} parent=0
    _
  %s6 = ssub.s32 1, %s4
  %s7 = scalar_select 0, %s6, %s4
  $region1: #{patch_embed_forward.1} parent=0
    #allocation2 [shape = 'u8[16384]{0}', space=vmem, size = 0x4000, scoped, tag = 'output window, operand 0, single buffered']
    #allocation3 [shape = 's32[1]{0}', space=sflag, size = 0x4, scoped, tag = 'scoped memory for patch_embed_forward.1']
    %8 = vsyncpa [#allocation3], 0
    // Predicated region
    $region2: #{patch_embed_forward.1} parent=1 // pred_check
      _
    $region3: #{patch_embed_forward.1} parent=1 // pred_check_branch
      %10 = sbr.rel (0) target = $region5
    $region4: #{patch_embed_forward.1} parent=1 // pred_region
      _
    $region5: #{patch_embed_forward.1} parent=1 // pred_fallthru
      _
    // Predicated region
    $region6: #{patch_embed_forward.1} parent=1 // pred_check
      _
    $region7: #{patch_embed_forward.1} parent=1 // pred_check_branch
      %12 = sbr.rel (0) target = $region9
    $region8: #{patch_embed_forward.1} parent=1 // pred_region
      _
    $region9: #{patch_embed_forward.1} parent=1 // pred_fallthru
      _
    // Predicated region
    $region10: #{patch_embed_forward.1} parent=1 // pred_check
      _
    $region11: #{patch_embed_forward.1} parent=1 // pred_check_branch
      %14 = sbr.rel (0) target = $region13
    $region12: #{patch_embed_forward.1} parent=1 // pred_region
      _
    $region13: #{patch_embed_forward.1} parent=1 // pred_fallthru
      _
    %v16 = vld [vmem:[%s0] sm:$0xf]
    %v17 = vld [vmem:[%s0 + $0x4] sm:$0xf]
    %v18 = vld [vmem:[%s0 + $0x8] sm:$0xf]
    %v19 = vld [vmem:[%s0 + $0xc] sm:$0xf]
    %v20 = vld [vmem:[%s1] sm:$0xf]
    %v21 = vld [vmem:[%s1 + $0x4] sm:$0xf]
    %v22 = vld [vmem:[%s1 + $0x8] sm:$0xf]
    %v23 = vld [vmem:[%s1 + $0xc] sm:$0xf]
    %v24 = vld [vmem:[%s1 + $0x10] sm:$0xf]
    %v25 = vld [vmem:[%s1 + $0x14] sm:$0xf]
    %v26 = vld [vmem:[%s1 + $0x18] sm:$0xf]
    %v27 = vld [vmem:[%s1 + $0x1c] sm:$0xf]
    %v28 = vld [vmem:[%s2] sm:$0x1]
    %v30 = vlaneseq
    %v31 = vshrl.u32 %v30, 7
    %v32 = vsub.s32 0, %v31
    %v33 = vrot.slane %v28, %v32
    %v39 = vunpack.c.l.b16 %v16
    %v40 = vunpack.c.l.b16 %v17
    %v41 = vunpack.c.l.b16 %v18
    %v42 = vunpack.c.l.b16 %v19
    %v43 = vpack.c.b16 %v40, %v39
    %v44 = vpack.c.b16 %v42, %v41
    %v53 = vunpack.c.l.b16 %v20
    %v54 = vunpack.c.l.b16 %v21
    %v55 = vunpack.c.l.b16 %v22
    %v56 = vunpack.c.l.b16 %v23
    %v57 = vunpack.c.l.b16 %v24
    %v58 = vunpack.c.l.b16 %v25
    %v59 = vunpack.c.l.b16 %v26
    %v60 = vunpack.c.l.b16 %v27
    %v61 = vpack.c.b16 %v54, %v53
    %v62 = vpack.c.b16 %v56, %v55
    %v63 = vpack.c.b16 %v58, %v57
    %v64 = vpack.c.b16 %v60, %v59
    %vm69 = vcmask 523264
    %v71 = vsel %vm69, %v43, 0
    %v74 = vsel %vm69, %v44, 0
    %76 = vmatprep.subr.bf16.mxu0 0
    %77 = vmatpush1.bf16.msra.mxu0 %v61
    %78 = vmatprep.subr.bf16.mxu0 0
    %79 = vmatpush1.bf16.msra.mxu0 %v62
    %80 = vmatprep.subr.bf16.mxu0 0
    %81 = vmatpush1.bf16.msra.mxu0 %v63
    %82 = vmatprep.subr.bf16.mxu0 0
    %83 = vmatpush1.bf16.msra.mxu0 %v64
    %84 = vmatprep.subr.bf16.mxu0 0
    %85 = vmatpush1.bf16.msra.mxu0 0
    %86 = vmatprep.subr.bf16.mxu0 0
    %87 = vmatpush1.bf16.msra.mxu0 0
    %88 = vmatprep.subr.bf16.mxu0 0
    %89 = vmatpush1.bf16.msra.mxu0 0
    %90 = vmatprep.subr.bf16.mxu0 0
    %91 = vmatpush1.bf16.msra.mxu0 0
    %92 = vmatprep.subr.bf16.mxu0 0
    %93 = vmatpush1.bf16.msra.mxu0 0
    %94 = vmatprep.subr.bf16.mxu0 0
    %95 = vmatpush1.bf16.msra.mxu0 0
    %96 = vmatprep.subr.bf16.mxu0 0
    %97 = vmatpush1.bf16.msra.mxu0 0
    %98 = vmatprep.subr.bf16.mxu0 0
    %99 = vmatpush1.bf16.msra.mxu0 0
    %100 = vmatprep.subr.bf16.mxu0 0
    %101 = vmatpush1.bf16.msra.mxu0 0
    %102 = vmatprep.subr.bf16.mxu0 0
    %103 = vmatpush1.bf16.msra.mxu0 0
    %104 = vmatprep.subr.bf16.mxu0 0
    %105 = vmatpush1.bf16.msra.mxu0 0
    %106 = vmatprep.subr.bf16.mxu0 0
    %107 = vmatpush1.bf16.msra.mxu0 0
    %108 = vmatprep.mubr.bf16.mxu0 0
    %109 = vmatmul.mubr.bf16.gmra.mrb[0].mxu0 %v71
    %v110 = vpop.f32.mrb[0].mxu0
    %v111 = vadd.f32 %v33, %v110
    %v112 = vpop.f32.mrb[0].mxu0
    %v113 = vpop.f32.mrb[0].mxu0
    %v114 = vadd.f32 %v33, %v113
    %v115 = vpop.f32.mrb[0].mxu0
    %116 = vmatprep.mubr.bf16.mxu0 0
    %117 = vmatmul.mubr.bf16.gmra.mrb[0].mxu0 %v74
    %v118 = vpop.f32.mrb[0].mxu0
    %v119 = vadd.f32 %v33, %v118
    %v120 = vpop.f32.mrb[0].mxu0
    %v121 = vpop.f32.mrb[0].mxu0
    %v122 = vadd.f32 %v33, %v121
    %v123 = vpop.f32.mrb[0].mxu0
    %124 = vdwg.mxu0
    %vm125 = vcmask 261120
    %126 = vst.msk [vmem:[#allocation2] sm:$0xff] %vm125, %v111
    %127 = vst.msk [vmem:[#allocation2 + $0x8] sm:$0xff] %vm125, %v114
    %128 = vst.msk [vmem:[#allocation2 + $0x10] sm:$0xff] %vm125, %v119
    %129 = vst.msk [vmem:[#allocation2 + $0x18] sm:$0xff] %vm125, %v122
    // Predicated region
    $region14: #{patch_embed_forward.1} parent=1 // pred_check
      _
    $region15: #{patch_embed_forward.1} parent=1 // pred_check_branch
      %131 = sbr.rel (0) target = $region17
    $region16: #{patch_embed_forward.1} parent=1 // pred_region
      %s133 = ssub.s32 512, 512
      %134 = vsyncadd [#allocation3], %s133
      %s135 = sshll.u32 [#allocation2], 4
      %s136 = int_to_ptr.vmem [resolvable:$true] %s135
      %141 = dma.vmem_to_hbm [thread:$0]  %s136, 512, %s3, [#allocation3], 128, 128, 8
    $region17: #{patch_embed_forward.1} parent=1 // pred_fallthru
      _
    // Predicated region
    $region18: #{patch_embed_forward.1} parent=1 // pred_check
      _
    $region19: #{patch_embed_forward.1} parent=1 // pred_check_branch
      %143 = sbr.rel (0) target = $region21
    $region20: #{patch_embed_forward.1} parent=1 // pred_region
      %144 = dma.done [#allocation3], 512
    $region21: #{patch_embed_forward.1} parent=1 // pred_fallthru
      _
    %145 = vsyncpa [#allocation3], 1

</llo_original>
